<compile_context>
chip_gen: v7x
topology: tpu7x:2x2x1
jax: 0.10.0
libtpu: 0.0.40
codegen_flags: <defaults>
</compile_context>

<pallas_src>
import jax
import jax.numpy as jnp
import numpy as np
from jax.experimental import pallas as pl
from jax.experimental.pallas import tpu as pltpu

_LANES = 128


def _round_up(x, m):
    return (x + m - 1) // m * m


def _wce_kernel(logits_ref, tgt_ref, w_ref, part_ref):
    """One grid step: (C, TBS, 128) slabs of logits/targets -> (1, 128) per-lane partial sums."""
    o = logits_ref[...].astype(jnp.float32)       # (C, TBS, 128)
    t = tgt_ref[...].astype(jnp.float32)          # (C, TBS, 128)
    w = w_ref[...]                                # (C, 1, 128) float32 class weights

    # Numerically-stable log_softmax over the class axis.  The class axis is the *leading*
    # axis, so these reductions lower to C-way elementwise combines (VPU/EUP), not XLU
    # cross-lane reductions.
    m = jnp.max(o, axis=0, keepdims=True)                                 # (1, TBS, 128)
    lse = jnp.log(jnp.sum(jnp.exp(o - m), axis=0, keepdims=True)) + m     # (1, TBS, 128)
    logp = o - lse                                                        # (C, TBS, 128)

    ce = -jnp.sum(t * logp, axis=0)               # (TBS, 128)  per-sample CE
    sw = jnp.sum(t * w, axis=0)                   # (TBS, 128)  per-sample weight

    # Per-lane partial sums for this block (zero-padded samples have t==0 -> contribute 0).
    part_ref[...] = jnp.sum(ce * sw, axis=0, keepdims=True)               # (1, 128)


def weighted_cross_entropy_loss(outputs, targets, weights, *, block_rows=None,
                                pipeline_budget_bytes=16 * 1024 * 1024):
    """Pallas weighted-CE.  outputs: reshapeable to targets.shape == (B, C); weights: (C,)."""
    outputs = outputs.reshape(targets.shape)
    B, C = targets.shape

    itemsize = max(jnp.dtype(outputs.dtype).itemsize, jnp.dtype(targets.dtype).itemsize)
    rows_needed = _round_up(pl.cdiv(B, _LANES), 8)           # slab-rows covering the batch

    if block_rows is None:
        # Keep 2 inputs x 2 pipeline buffers within ~pipeline_budget_bytes of VMEM.
        per_row_bytes = C * _LANES * itemsize                # one slab-row of ONE input
        block_rows = pipeline_budget_bytes // (4 * per_row_bytes)
    block_rows = int(max(8, min(_round_up(int(block_rows), 8), rows_needed)))

    num_blocks = pl.cdiv(rows_needed, block_rows)
    Bp = num_blocks * block_rows * _LANES                    # padded batch size

    def to_slabs(x):
        # (B, C) -> (C, B) -> zero-pad batch -> per-class (rows, 128) slabs.  Layout plumbing
        # only; dtype (e.g. bf16) is preserved so the kernel streams the narrow dtype from HBM.
        xt = jnp.transpose(x, (1, 0))
        xt = jnp.pad(xt, ((0, 0), (0, Bp - B)))
        return xt.reshape(C, Bp // _LANES, _LANES)

    o3 = to_slabs(outputs)
    t3 = to_slabs(targets)
    w3 = jnp.broadcast_to(
        jnp.asarray(weights, dtype=jnp.float32).reshape(C, 1, 1), (C, 1, _LANES))

    partials = pl.pallas_call(
        _wce_kernel,
        out_shape=jax.ShapeDtypeStruct((num_blocks, _LANES), jnp.float32),
        grid=(num_blocks,),
        in_specs=[
            pl.BlockSpec((C, block_rows, _LANES), lambda i: (0, i, 0)),   # logits slabs
            pl.BlockSpec((C, block_rows, _LANES), lambda i: (0, i, 0)),   # target slabs
            pl.BlockSpec((C, 1, _LANES), lambda i: (0, 0, 0)),            # class weights (resident)
        ],
        out_specs=pl.BlockSpec((1, _LANES), lambda i: (i, 0)),            # per-block partials
        compiler_params=pltpu.CompilerParams(
            dimension_semantics=("parallel",),        # blocks are independent -> v7x 2-TC
            vmem_limit_bytes=32 * 1024 * 1024,        # raise v5e scoped default; safe on v7x
        ),
    )(o3, t3, w3)

    # Tiny final reduction + mean over the *original* batch size (matches the module).
    return jnp.sum(partials) / jnp.float32(B)


def _reference_loss(outputs, targets, weights):
    """Pure-JAX reference mirroring the PyTorch forward."""
    outputs = outputs.reshape(targets.shape).astype(jnp.float32)
    targets = targets.astype(jnp.float32)
    logp = jax.nn.log_softmax(outputs, axis=-1)
    ce = -jnp.sum(targets * logp, axis=-1)
    sw = jnp.sum(targets * jnp.asarray(weights, jnp.float32)[None, :], axis=-1)
    return jnp.mean(ce * sw)


if __name__ == "__main__":
    key = jax.random.PRNGKey(0)
    k1, k2, k3, k4 = jax.random.split(key, 4)

    # Case 1: module defaults -- n_classes=2, unit weights, one-hot targets, float32 logits.
    B1, C1 = 64, 2
    logits1 = jax.random.normal(k1, (B1, C1), dtype=jnp.float32)
    labels1 = jax.random.randint(k2, (B1,), 0, C1)
    targets1 = jax.nn.one_hot(labels1, C1, dtype=jnp.float32)
    weights1 = jnp.ones((C1,), dtype=jnp.float32)

    loss1 = jax.block_until_ready(weighted_cross_entropy_loss(logits1, targets1, weights1))
    ref1 = _reference_loss(logits1, targets1, weights1)
    np.testing.assert_allclose(np.asarray(loss1), np.asarray(ref1), rtol=1e-5, atol=1e-5)

    # Case 2: bf16 inputs (half_precision path), non-unit class weights, odd batch size.
    B2, C2 = 50, 3
    logits2 = jax.random.normal(k3, (B2, C2), dtype=jnp.float32).astype(jnp.bfloat16)
    labels2 = jax.random.randint(k4, (B2,), 0, C2)
    targets2 = jax.nn.one_hot(labels2, C2, dtype=jnp.bfloat16)
    weights2 = jnp.array([0.5, 1.5, 2.0], dtype=jnp.float32)

    loss2 = jax.block_until_ready(weighted_cross_entropy_loss(logits2, targets2, weights2))
    ref2 = _reference_loss(logits2, targets2, weights2)
    np.testing.assert_allclose(np.asarray(loss2), np.asarray(ref2), rtol=1e-4, atol=1e-4)

    print("KERNEL_OK")
</pallas_src>

<mosaic_0001>
module attributes {stable_mosaic.version = 11 : i64} {
  func.func @_wce_kernel(%arg0: i32, %arg1: memref<2x8x128xf32, #tpu.memory_space<vmem>>, %arg2: memref<2x8x128xf32, #tpu.memory_space<vmem>>, %arg3: memref<2x1x128xf32, #tpu.memory_space<vmem>>, %arg4: memref<1x128xf32, #tpu.memory_space<vmem>>) attributes {dimension_semantics = [#tpu.dimension_semantics<parallel>], iteration_bounds = array<i64: 1>, scalar_prefetch = 0 : i64, scratch_operands = 0 : i64, tpu.core_type = #tpu.core_type<tc>, window_params = [{transform_indices = @transform_0, window_bounds = array<i64: 2, 8, 128>}, {transform_indices = @transform_1, window_bounds = array<i64: 2, 8, 128>}, {pipeline_mode = #tpu.pipeline_mode<synchronous>, transform_indices = @transform_2, window_bounds = array<i64: 2, 1, 128>}, {transform_indices = @transform_3, window_bounds = array<i64: 1, 128>}]} {
    %c0 = arith.constant 0 : index
    %c0_0 = arith.constant 0 : index
    %c0_1 = arith.constant 0 : index
    %0 = vector.load %arg1[%c0, %c0_0, %c0_1] : memref<2x8x128xf32, #tpu.memory_space<vmem>>, vector<2x8x128xf32>
    %c0_2 = arith.constant 0 : index
    %c0_3 = arith.constant 0 : index
    %c0_4 = arith.constant 0 : index
    %1 = vector.load %arg2[%c0_2, %c0_3, %c0_4] : memref<2x8x128xf32, #tpu.memory_space<vmem>>, vector<2x8x128xf32>
    %c0_5 = arith.constant 0 : index
    %c0_6 = arith.constant 0 : index
    %c0_7 = arith.constant 0 : index
    %2 = vector.load %arg3[%c0_5, %c0_6, %c0_7] : memref<2x1x128xf32, #tpu.memory_space<vmem>>, vector<2x1x128xf32>
    %cst = arith.constant dense<0xFF800000> : vector<8x128xf32>
    %3 = vector.multi_reduction <maximumf>, %0, %cst [0] : vector<2x8x128xf32> to vector<8x128xf32>
    %4 = vector.shape_cast %3 : vector<8x128xf32> to vector<1x8x128xf32>
    %5 = vector.broadcast %4 : vector<1x8x128xf32> to vector<2x8x128xf32>
    %6 = arith.subf %0, %5 : vector<2x8x128xf32>
    %7 = math.exp %6 : vector<2x8x128xf32>
    %cst_8 = arith.constant dense<0.000000e+00> : vector<8x128xf32>
    %8 = vector.multi_reduction <add>, %7, %cst_8 [0] : vector<2x8x128xf32> to vector<8x128xf32>
    %9 = vector.shape_cast %8 : vector<8x128xf32> to vector<1x8x128xf32>
    %10 = math.log %9 : vector<1x8x128xf32>
    %11 = arith.addf %10, %4 : vector<1x8x128xf32>
    %12 = vector.broadcast %11 : vector<1x8x128xf32> to vector<2x8x128xf32>
    %13 = arith.subf %0, %12 : vector<2x8x128xf32>
    %14 = arith.mulf %1, %13 : vector<2x8x128xf32>
    %cst_9 = arith.constant dense<0.000000e+00> : vector<8x128xf32>
    %15 = vector.multi_reduction <add>, %14, %cst_9 [0] : vector<2x8x128xf32> to vector<8x128xf32>
    %cst_10 = arith.constant 0.000000e+00 : f32
    %16 = vector.broadcast %cst_10 : f32 to vector<8x128xf32>
    %17 = arith.subf %16, %15 : vector<8x128xf32>
    %18 = vector.broadcast %2 : vector<2x1x128xf32> to vector<2x8x128xf32>
    %19 = arith.mulf %1, %18 : vector<2x8x128xf32>
    %cst_11 = arith.constant dense<0.000000e+00> : vector<8x128xf32>
    %20 = vector.multi_reduction <add>, %19, %cst_11 [0] : vector<2x8x128xf32> to vector<8x128xf32>
    %21 = arith.mulf %17, %20 : vector<8x128xf32>
    %cst_12 = arith.constant dense<0.000000e+00> : vector<128xf32>
    %22 = vector.multi_reduction <add>, %21, %cst_12 [0] : vector<8x128xf32> to vector<128xf32>
    %23 = vector.shape_cast %22 : vector<128xf32> to vector<1x128xf32>
    %c0_13 = arith.constant 0 : index
    %c0_14 = arith.constant 0 : index
    %24 = vector.load %arg4[%c0_13, %c0_14] : memref<1x128xf32, #tpu.memory_space<vmem>>, vector<1x128xf32>
    tpu.vector_store %arg4[%c0_13, %c0_14], %23 {strides = array<i32>} : memref<1x128xf32, #tpu.memory_space<vmem>>, vector<1x128xf32>,
    return
  }
  func.func @transform_0(%arg0: i32) -> (i32, i32, i32) {
    %c0_i32 = arith.constant 0 : i32
    %c0_i32_0 = arith.constant 0 : i32
    %c0_i32_1 = arith.constant 0 : i32
    return %c0_i32, %arg0, %c0_i32_0 : i32, i32, i32
  }
  func.func @transform_1(%arg0: i32) -> (i32, i32, i32) {
    %c0_i32 = arith.constant 0 : i32
    %c0_i32_0 = arith.constant 0 : i32
    %c0_i32_1 = arith.constant 0 : i32
    return %c0_i32, %arg0, %c0_i32_0 : i32, i32, i32
  }
  func.func @transform_2(%arg0: i32) -> (i32, i32, i32) {
    %c0_i32 = arith.constant 0 : i32
    %c0_i32_0 = arith.constant 0 : i32
    %c0_i32_1 = arith.constant 0 : i32
    %c0_i32_2 = arith.constant 0 : i32
    return %c0_i32, %c0_i32_0, %c0_i32_1 : i32, i32, i32
  }
  func.func @transform_3(%arg0: i32) -> (i32, i32) {
    %c0_i32 = arith.constant 0 : i32
    %c0_i32_0 = arith.constant 0 : i32
    return %arg0, %c0_i32 : i32, i32
  }
}

</mosaic_0001>

<llo_original>
// kernel: tpu_custom_call.1
$region0: #{tpu_custom_call.1}
  #allocation0 [shape = 'u32[]', space=smem, size = 0x4, offset = 0x4, fixed_abs, tag = 'smem constant byte address 0x4 - core index']
  #allocation1 [shape = 'u32[144,128]{1,0:T(1,128)}', space=vmem, size = 0x12000, scoped, tag = 'internal scratch']
  %s0 = inlined_call_operand.hbm [shape: f32[2,8,128], index: 0, kind: input, shape index: {}]
  %s1 = inlined_call_operand.hbm [shape: f32[2,8,128], index: 1, kind: input, shape index: {}]
  %s2 = inlined_call_operand.vmem [shape: f32[2,1,128], index: 2, kind: input, shape index: {}]
  %s3 = inlined_call_operand.hbm [shape: f32[1,128], index: 3, kind: output, shape index: {}]
  %s4 = sld [smem:[#allocation0]]
  $region30: #{tpu_custom_call.1} parent=0
    _
  %s6 = ssub.s32 1, %s4
  %s7 = scalar_select 0, %s6, %s4
  $region1: #{tpu_custom_call.1} parent=0
    #allocation2 [shape = 'u8[8192]{0}', space=vmem, size = 0x2000, scoped, tag = 'input window, operand 0, single buffered']
    #allocation3 [shape = 's32[1]{0}', space=sflag, size = 0x4, scoped, tag = 'scoped memory for tpu_custom_call.1']
    #allocation4 [shape = 's32[1]{0}', space=sflag, size = 0x4, scoped, tag = 'scoped memory for tpu_custom_call.1']
    #allocation5 [shape = 'u8[8192]{0}', space=vmem, size = 0x2000, scoped, tag = 'input window, operand 1, single buffered']
    #allocation6 [shape = 's32[1]{0}', space=sflag, size = 0x4, scoped, tag = 'scoped memory for tpu_custom_call.1']
    #allocation7 [shape = 'u8[512]{0}', space=vmem, size = 0x400, scoped, tag = 'output window, operand 0, single buffered']
    %8 = vsyncpa [#allocation3], 0
    %9 = vsyncpa [#allocation6], 0
    %10 = vsyncpa [#allocation4], 0
    // Predicated region
    $region2: #{tpu_custom_call.1} parent=1 // pred_check
      _
    $region3: #{tpu_custom_call.1} parent=1 // pred_check_branch
      %12 = sbr.rel (0) target = $region5
    $region4: #{tpu_custom_call.1} parent=1 // pred_region
      %s14 = ssub.s32 256, 256
      %15 = vsyncadd [#allocation3], %s14
      %s16 = sshll.u32 [#allocation2], 4
      %s17 = int_to_ptr.vmem [resolvable:$true] %s16
      %22 = dma.hbm_to_vmem [thread:$0]  %s0, 256, %s17, [#allocation3], 128, 128, 8
    $region5: #{tpu_custom_call.1} parent=1 // pred_fallthru
      _
    // Predicated region
    $region6: #{tpu_custom_call.1} parent=1 // pred_check
      _
    $region7: #{tpu_custom_call.1} parent=1 // pred_check_branch
      %24 = sbr.rel (0) target = $region9
    $region8: #{tpu_custom_call.1} parent=1 // pred_region
      %s26 = ssub.s32 256, 256
      %27 = vsyncadd [#allocation6], %s26
      %s28 = sshll.u32 [#allocation5], 4
      %s29 = int_to_ptr.vmem [resolvable:$true] %s28
      %34 = dma.hbm_to_vmem [thread:$0]  %s1, 256, %s29, [#allocation6], 128, 128, 8
    $region9: #{tpu_custom_call.1} parent=1 // pred_fallthru
      _
    // Predicated region
    $region10: #{tpu_custom_call.1} parent=1 // pred_check
      _
    $region11: #{tpu_custom_call.1} parent=1 // pred_check_branch
      %36 = sbr.rel (0) target = $region13
    $region12: #{tpu_custom_call.1} parent=1 // pred_region
      _
    $region13: #{tpu_custom_call.1} parent=1 // pred_fallthru
      _
    // Predicated region
    $region14: #{tpu_custom_call.1} parent=1 // pred_check
      _
    $region15: #{tpu_custom_call.1} parent=1 // pred_check_branch
      %38 = sbr.rel (0) target = $region17
    $region16: #{tpu_custom_call.1} parent=1 // pred_region
      %39 = dma.done [#allocation3], 256
    $region17: #{tpu_custom_call.1} parent=1 // pred_fallthru
      _
    // Predicated region
    $region18: #{tpu_custom_call.1} parent=1 // pred_check
      _
    $region19: #{tpu_custom_call.1} parent=1 // pred_check_branch
      %41 = sbr.rel (0) target = $region21
    $region20: #{tpu_custom_call.1} parent=1 // pred_region
      %42 = dma.done [#allocation6], 256
    $region21: #{tpu_custom_call.1} parent=1 // pred_fallthru
      _
    %v43 = vld [vmem:[#allocation2] sm:$0xff]
    %v44 = vld [vmem:[#allocation2 + $0x8] sm:$0xff]
    %v45 = vld [vmem:[#allocation5] sm:$0xff]
    %v46 = vld [vmem:[#allocation5 + $0x8] sm:$0xff]
    %v47 = vld [vmem:[%s2] sm:$0x1]
    %v48 = vld [vmem:[%s2 + $0x1] sm:$0x1]
    %v49 = vmax.f32 %v43, %v44
    %v50 = vsub.f32 %v43, %v49
    %v51 = vsub.f32 %v44, %v49
    %v52 = vmul.f32 %v50, 1.442695
    %v53 = vpow.pop %v52
    %v54 = vmul.f32 %v51, 1.442695
    %v55 = vpow.pop %v54
    %v56 = vadd.f32 %v53, %v55
    %v57 = vlog2.pop %v56
    %v58 = vmul.f32 %v57, 0.6931472
    %v59 = vadd.f32 %v58, %v49
    %v60 = vsub.f32 %v43, %v59
    %v61 = vsub.f32 %v44, %v59
    %v62 = vmul.f32 %v45, %v60
    %v63 = vmul.f32 %v46, %v61
    %v64 = vadd.f32 %v62, %v63
    %v65 = vsub.f32 0.0, %v64
    %v68 = vlaneseq
    %v69 = vshrl.u32 %v68, 7
    %v70 = vsub.s32 0, %v69
    %v71 = vrot.slane %v47, %v70
    %v72 = vlaneseq
    %v73 = vshrl.u32 %v72, 7
    %v74 = vsub.s32 0, %v73
    %v75 = vrot.slane %v48, %v74
    %v78 = vmul.f32 %v45, %v71
    %v79 = vmul.f32 %v46, %v75
    %v80 = vadd.f32 %v78, %v79
    %v81 = vmul.f32 %v65, %v80
    %v82 = vrot.slane %v81, 4
    %v83 = vadd.f32 %v81, %v82
    %v84 = vrot.slane %v83, 2
    %v85 = vadd.f32 %v83, %v84
    %v86 = vrot.slane %v85, 1
    %v87 = vadd.f32 %v85, %v86
    %88 = vst [vmem:[#allocation7] sm:$0x1] %v87
    // Predicated region
    $region22: #{tpu_custom_call.1} parent=1 // pred_check
      _
    $region23: #{tpu_custom_call.1} parent=1 // pred_check_branch
      %90 = sbr.rel (0) target = $region25
    $region24: #{tpu_custom_call.1} parent=1 // pred_region
      %s92 = ssub.s32 16, 16
      %93 = vsyncadd [#allocation4], %s92
      %s95 = sshll.u32 [#allocation7], 4
      %s96 = int_to_ptr.vmem [resolvable:$true] %s95
      %98 = dma.vmem_to_hbm [thread:$0]  %s96, 16, %s3, [#allocation4]
    $region25: #{tpu_custom_call.1} parent=1 // pred_fallthru
      _
    // Predicated region
    $region26: #{tpu_custom_call.1} parent=1 // pred_check
      _
    $region27: #{tpu_custom_call.1} parent=1 // pred_check_branch
      %100 = sbr.rel (0) target = $region29
    $region28: #{tpu_custom_call.1} parent=1 // pred_region
      %101 = dma.done [#allocation4], 16
    $region29: #{tpu_custom_call.1} parent=1 // pred_fallthru
      _
    %102 = vsyncpa [#allocation3], 1
    %103 = vsyncpa [#allocation6], 1
    %104 = vsyncpa [#allocation4], 1

</llo_original>
